<compile_context>
chip_gen: v7x
topology: tpu7x:2x2x1
jax: 0.10.0
libtpu: 0.0.40
codegen_flags: <defaults>
</compile_context>

<pallas_src>
import functools

import jax
import jax.numpy as jnp
from jax.experimental import pallas as pl
from jax.experimental.pallas import tpu as pltpu

_MiB = 1024 * 1024


def _round_up(a: int, b: int) -> int:
    return ((a + b - 1) // b) * b


def _cdiv(a: int, b: int) -> int:
    return -(-a // b)


def _tpu_vmem_bytes() -> int:
    """Per-core VMEM capacity; conservative 64 MiB fallback if unavailable."""
    try:
        info = pltpu.get_tpu_info()
        v = getattr(info, "vmem_capacity_bytes", None)
        if v:
            return int(v)
    except Exception:
        pass
    return 64 * _MiB


# --------------------------------------------------------------------------
# Kernels
# --------------------------------------------------------------------------
def ffn_kernel_acc(x_ref, w13_ref, w2_ref, o_ref, acc_ref, *, th):
    """One (row-tile, hidden-tile) step of out = (silu(x@w1)*(x@w3)) @ w2."""
    k = pl.program_id(1)

    @pl.when(k == 0)
    def _():
        acc_ref[...] = jnp.zeros_like(acc_ref)

    x = x_ref[...]                                          # [tm, dim]
    h13 = jnp.dot(x, w13_ref[...],
                  preferred_element_type=jnp.float32)       # [tm, 2*th]
    h1 = h13[:, :th]                                        # silu branch
    h3 = h13[:, th:]                                        # linear branch
    h = (h1 * jax.nn.sigmoid(h1)) * h3                      # f32 gate (VPU/EUP)
    acc_ref[...] += jnp.dot(h.astype(w2_ref.dtype), w2_ref[...],
                            preferred_element_type=jnp.float32)

    @pl.when(k == pl.num_programs(1) - 1)
    def _():
        o_ref[...] = acc_ref[...].astype(o_ref.dtype)


def ffn_kernel_single(x_ref, w13_ref, w2_ref, o_ref, *, th):
    """nk==1 fast path: no accumulator scratch, weights VMEM-resident."""
    x = x_ref[...]
    h13 = jnp.dot(x, w13_ref[...], preferred_element_type=jnp.float32)
    h1 = h13[:, :th]
    h3 = h13[:, th:]
    h = (h1 * jax.nn.sigmoid(h1)) * h3
    o_ref[...] = jnp.dot(h.astype(w2_ref.dtype), w2_ref[...],
                         preferred_element_type=jnp.float32).astype(o_ref.dtype)


# --------------------------------------------------------------------------
# Tile / VMEM sizing (per TPU generation)
# --------------------------------------------------------------------------
def _choose_tiles(dim, hidden, itemsize, *, tm=None, th=None, n_rows=None):
    cap = _tpu_vmem_bytes()
    big = cap >= 96 * _MiB                          # v5e / v6e (128 MiB)
    if big:
        tm_v = 1024 if tm is None else tm
        th_v = 512 if th is None else th
        limit = min(cap - 24 * _MiB, 100 * _MiB)
    else:                                           # v7x-class (64 MiB)
        tm_v = 512 if tm is None else tm
        th_v = 256 if th is None else th
        limit = max(min(cap - 12 * _MiB, 52 * _MiB), 24 * _MiB)

    th_v = min(th_v, hidden)

    if n_rows is not None:
        tm_v = min(tm_v, _round_up(n_rows, 8))
        # v7x: 2 TensorCores -> keep >=2 row tiles so both cores get work.
        if not big and tm is None and _cdiv(n_rows, tm_v) < 2 and n_rows > 8:
            tm_v = max(8, _round_up(_cdiv(n_rows, 2), 8))
    tm_v = max(8, (tm_v // 8) * 8)

    def footprint(tm_, th_):
        nk_ = _cdiv(hidden, th_)
        b = 2 * tm_ * dim * itemsize           # x     (double-buffered)
        b += 2 * dim * 2 * th_ * itemsize      # w1|w3 (double-buffered)
        b += 2 * th_ * dim * itemsize          # w2    (double-buffered)
        b += 2 * tm_ * dim * itemsize          # out   (double-buffered)
        b += tm_ * 2 * th_ * 4                 # f32 intermediate h13
        if nk_ > 1:
            b += tm_ * dim * 4                 # f32 accumulator scratch
        return b

    budget = int(0.85 * limit)

    # Weight-resident lever: if the full hidden dim fits, stream weights once.
    if th is None and hidden > th_v and footprint(tm_v, hidden) <= budget:
        th_v = hidden

    # Over budget: shrink the hidden tile first (keeps MXU row height), then tm.
    while th is None and th_v > 128 and footprint(tm_v, th_v) > budget:
        th_v = max(128, th_v // 2)
    while tm is None and tm_v > 64 and footprint(tm_v, th_v) > budget:
        tm_v = max(64, _round_up(tm_v // 2, 8))

    return tm_v, th_v, int(limit)


# --------------------------------------------------------------------------
# Weight preparation (call once at weight-load time — hoisted out of hot path)
# --------------------------------------------------------------------------
def _prepare_weights(w1, w3, w2, th, w_dtype):
    """Fuse w1|w3 into contiguous per-k slabs and reshape w2 per-k.

    Returns w13: (nk, dim, 2*th), w2r: (nk, th, dim), padded hidden, nk.
    """
    dim, hidden = w1.shape
    hidden_p = _round_up(hidden, th)
    if hidden_p != hidden:
        pad = hidden_p - hidden                 # zero columns/rows: exact no-op
        w1 = jnp.pad(w1, ((0, 0), (0, pad)))
        w3 = jnp.pad(w3, ((0, 0), (0, pad)))
        w2 = jnp.pad(w2, ((0, pad), (0, 0)))
    nk = hidden_p // th
    w13 = jnp.concatenate(
        [w1.reshape(dim, nk, th).transpose(1, 0, 2),
         w3.reshape(dim, nk, th).transpose(1, 0, 2)],
        axis=-1).astype(w_dtype)                # (nk, dim, 2*th), contiguous per k
    w2r = w2.reshape(nk, th, dim).astype(w_dtype)
    return w13, w2r, hidden_p, nk


# --------------------------------------------------------------------------
# pallas_call wrapper (2-D rows x dim)
# --------------------------------------------------------------------------
def _feed_forward_2d(x, w13, w2r, *, tm, th, nk, vmem_limit):
    N, dim = x.shape
    tm = max(8, (min(tm, _round_up(N, 8)) // 8) * 8)
    nrows = _cdiv(N, tm)                        # boundary block clipped by Pallas

    if nk == 1:
        kernel = functools.partial(ffn_kernel_single, th=th)
        grid = (nrows,)
        in_specs = [
            pl.BlockSpec((tm, dim), lambda i: (i, 0)),
            pl.BlockSpec((None, dim, 2 * th), lambda i: (0, 0, 0)),   # resident
            pl.BlockSpec((None, th, dim), lambda i: (0, 0, 0)),       # resident
        ]
        out_specs = pl.BlockSpec((tm, dim), lambda i: (i, 0))
        scratch = []
        dims = ("parallel",)
    else:
        kernel = functools.partial(ffn_kernel_acc, th=th)
        grid = (nrows, nk)
        in_specs = [
            pl.BlockSpec((tm, dim), lambda i, k: (i, 0)),
            pl.BlockSpec((None, dim, 2 * th), lambda i, k: (k, 0, 0)),
            pl.BlockSpec((None, th, dim), lambda i, k: (k, 0, 0)),
        ]
        out_specs = pl.BlockSpec((tm, dim), lambda i, k: (i, 0))
        scratch = [pltpu.VMEM((tm, dim), jnp.float32)]
        dims = ("parallel", "arbitrary")

    w_bytes = (w13.size * w13.dtype.itemsize + w2r.size * w2r.dtype.itemsize)
    n_weight_streams = nrows if nk > 1 else 1   # weights re-streamed per row tile
    cost = pl.CostEstimate(
        flops=6 * N * dim * (nk * th),
        transcendentals=N * nk * th,
        bytes_accessed=2 * N * dim * x.dtype.itemsize + n_weight_streams * w_bytes,
    )

    return pl.pallas_call(
        kernel,
        out_shape=jax.ShapeDtypeStruct((N, dim), x.dtype),
        grid_spec=pltpu.PrefetchScalarGridSpec(
            num_scalar_prefetch=0,
            grid=grid,
            in_specs=in_specs,
            out_specs=out_specs,
            scratch_shapes=scratch,
        ),
        compiler_params=pltpu.CompilerParams(
            dimension_semantics=dims,
            vmem_limit_bytes=vmem_limit,
        ),
        cost_estimate=cost,
    )(x, w13, w2r)


# --------------------------------------------------------------------------
# Public API
# --------------------------------------------------------------------------
def make_feed_forward(w1, w3, w2, *, tm=None, th=None, compute_dtype=None,
                      n_rows_hint=None):
    """Prepare weights once and return a jitted fn x[..., dim] -> y[..., dim].

    compute_dtype: e.g. jnp.bfloat16 to cast activations+weights for full MXU
    rate (recommended on v5e); output is cast back to x.dtype.
    """
    dim, hidden = w1.shape
    w_dtype = (jnp.dtype(compute_dtype) if compute_dtype is not None
               else jnp.result_type(w1, w3, w2))
    itemsize = jnp.dtype(w_dtype).itemsize

    tm_sel, th_sel, vmem_limit = _choose_tiles(
        dim, hidden, itemsize, tm=tm, th=th, n_rows=n_rows_hint)

    # Hoisted weight fusion: computed once here, closed over by the jitted fn.
    w13, w2r, _hidden_p, nk = _prepare_weights(w1, w3, w2, th_sel, w_dtype)

    @jax.jit
    def ffn(x):
        orig_dtype = x.dtype
        lead = x.shape[:-1]
        x2 = x.reshape(-1, dim)
        if compute_dtype is not None:
            x2 = x2.astype(compute_dtype)
        y = _feed_forward_2d(x2, w13, w2r, tm=tm_sel, th=th_sel, nk=nk,
                             vmem_limit=vmem_limit)
        return y.astype(orig_dtype).reshape(*lead, dim)

    return ffn


def _reference(x, w1, w3, w2):
    h = jax.nn.silu(x @ w1) * (x @ w3)
    return h @ w2


# --------------------------------------------------------------------------
# Self-test
# --------------------------------------------------------------------------
if __name__ == "__main__":
    key = jax.random.PRNGKey(0)

    # --- Test 1: module-sized shapes; exercises the nk == 1 resident-weight path.
    B, S, dim, hidden = 2, 8, 32, 64
    kx, k1, k2, k3 = jax.random.split(key, 4)
    x = jax.random.normal(kx, (B, S, dim), jnp.float32)
    w1 = jax.random.normal(k1, (dim, hidden), jnp.float32) * (1.0 / dim ** 0.5)
    w3 = jax.random.normal(k3, (dim, hidden), jnp.float32) * (1.0 / dim ** 0.5)
    w2 = jax.random.normal(k2, (hidden, dim), jnp.float32) * (1.0 / hidden ** 0.5)

    ffn = make_feed_forward(w1, w3, w2, n_rows_hint=B * S)
    out = jax.block_until_ready(ffn(x))
    ref = _reference(x, w1, w3, w2)
    assert out.shape == (B, S, dim)
    assert jnp.allclose(out, ref, atol=1e-4, rtol=1e-4), \
        float(jnp.max(jnp.abs(out - ref)))

    # --- Test 2: boundary row tile (N=51, tm=16), hidden padding (320 -> 384)
    #     and the hidden-reduction accumulator path (nk = 3).
    B2, S2, dim2, hidden2 = 3, 17, 128, 320
    kx2, k12, k22, k32 = jax.random.split(jax.random.PRNGKey(1), 4)
    x2 = jax.random.normal(kx2, (B2, S2, dim2), jnp.float32)
    w12 = jax.random.normal(k12, (dim2, hidden2), jnp.float32) * (1.0 / dim2 ** 0.5)
    w32 = jax.random.normal(k32, (dim2, hidden2), jnp.float32) * (1.0 / dim2 ** 0.5)
    w22 = jax.random.normal(k22, (hidden2, dim2), jnp.float32) * (1.0 / hidden2 ** 0.5)

    ffn2 = make_feed_forward(w12, w32, w22, tm=16, th=128, n_rows_hint=B2 * S2)
    out2 = jax.block_until_ready(ffn2(x2))
    ref2 = _reference(x2, w12, w32, w22)
    assert out2.shape == (B2, S2, dim2)
    assert jnp.allclose(out2, ref2, atol=1e-3, rtol=1e-3), \
        float(jnp.max(jnp.abs(out2 - ref2)))

    print("KERNEL_OK")
</pallas_src>

<mosaic_0001>
module attributes {stable_mosaic.version = 11 : i64} {
  func.func @ffn_kernel_single(%arg0: i32, %arg1: memref<8x32xf32, #tpu.memory_space<vmem>>, %arg2: memref<1x32x128xf32, #tpu.memory_space<vmem>>, %arg3: memref<1x64x32xf32, #tpu.memory_space<vmem>>, %arg4: memref<8x32xf32, #tpu.memory_space<vmem>>) attributes {dimension_semantics = [#tpu.dimension_semantics<parallel>], iteration_bounds = array<i64: 2>, scalar_prefetch = 0 : i64, scratch_operands = 0 : i64, tpu.core_type = #tpu.core_type<tc>, window_params = [{transform_indices = @transform_0, window_bounds = array<i64: 8, 32>}, {pipeline_mode = #tpu.pipeline_mode<synchronous>, transform_indices = @transform_1, window_bounds = array<i64: 1, 32, 128>}, {pipeline_mode = #tpu.pipeline_mode<synchronous>, transform_indices = @transform_2, window_bounds = array<i64: 1, 64, 32>}, {transform_indices = @transform_3, window_bounds = array<i64: 8, 32>}]} {
    %c0 = arith.constant 0 : index
    %c0_0 = arith.constant 0 : index
    %0 = vector.load %arg1[%c0, %c0_0] : memref<8x32xf32, #tpu.memory_space<vmem>>, vector<8x32xf32>
    %c0_1 = arith.constant 0 : index
    %c0_2 = arith.constant 0 : index
    %c0_3 = arith.constant 0 : index
    %1 = vector.load %arg2[%c0_1, %c0_2, %c0_3] : memref<1x32x128xf32, #tpu.memory_space<vmem>>, vector<1x32x128xf32>
    %2 = vector.shape_cast %1 : vector<1x32x128xf32> to vector<32x128xf32>
    %cst = arith.constant dense<0.000000e+00> : vector<8x128xf32>
    %3 = tpu.matmul %0, %2, %cst {dimension_numbers = #tpu.dot_dimension_numbers<[1], [0], [0], [1], [0, 0, 1, 1], [], []>} : vector<8x32xf32>, vector<32x128xf32>, vector<8x128xf32> -> vector<8x128xf32>
    %4 = vector.extract_strided_slice %3 {offsets = [0, 0], sizes = [8, 64], strides = [1, 1]} : vector<8x128xf32> to vector<8x64xf32>
    %5 = vector.extract_strided_slice %3 {offsets = [0, 64], sizes = [8, 64], strides = [1, 1]} : vector<8x128xf32> to vector<8x64xf32>
    %6 = arith.negf %4 : vector<8x64xf32>
    %7 = math.exp %6 : vector<8x64xf32>
    %cst_4 = arith.constant 1.000000e+00 : f32
    %8 = vector.broadcast %cst_4 : f32 to vector<8x64xf32>
    %9 = arith.addf %8, %7 : vector<8x64xf32>
    %10 = arith.divf %8, %9 : vector<8x64xf32>
    %11 = arith.mulf %4, %10 : vector<8x64xf32>
    %12 = arith.mulf %11, %5 : vector<8x64xf32>
    %c0_5 = arith.constant 0 : index
    %c0_6 = arith.constant 0 : index
    %c0_7 = arith.constant 0 : index
    %13 = vector.load %arg3[%c0_5, %c0_6, %c0_7] : memref<1x64x32xf32, #tpu.memory_space<vmem>>, vector<1x64x32xf32>
    %14 = vector.shape_cast %13 : vector<1x64x32xf32> to vector<64x32xf32>
    %cst_8 = arith.constant dense<0.000000e+00> : vector<8x32xf32>
    %15 = tpu.matmul %12, %14, %cst_8 {dimension_numbers = #tpu.dot_dimension_numbers<[1], [0], [0], [1], [0, 0, 1, 1], [], []>} : vector<8x64xf32>, vector<64x32xf32>, vector<8x32xf32> -> vector<8x32xf32>
    %c0_9 = arith.constant 0 : index
    %c0_10 = arith.constant 0 : index
    %16 = vector.load %arg4[%c0_9, %c0_10] : memref<8x32xf32, #tpu.memory_space<vmem>>, vector<8x32xf32>
    tpu.vector_store %arg4[%c0_9, %c0_10], %15 {strides = array<i32>} : memref<8x32xf32, #tpu.memory_space<vmem>>, vector<8x32xf32>,
    return
  }
  func.func @transform_0(%arg0: i32) -> (i32, i32) {
    %c0_i32 = arith.constant 0 : i32
    %c0_i32_0 = arith.constant 0 : i32
    return %arg0, %c0_i32 : i32, i32
  }
  func.func @transform_1(%arg0: i32) -> (i32, i32, i32) {
    %c0_i32 = arith.constant 0 : i32
    %c0_i32_0 = arith.constant 0 : i32
    %c0_i32_1 = arith.constant 0 : i32
    %c0_i32_2 = arith.constant 0 : i32
    return %c0_i32, %c0_i32_0, %c0_i32_1 : i32, i32, i32
  }
  func.func @transform_2(%arg0: i32) -> (i32, i32, i32) {
    %c0_i32 = arith.constant 0 : i32
    %c0_i32_0 = arith.constant 0 : i32
    %c0_i32_1 = arith.constant 0 : i32
    %c0_i32_2 = arith.constant 0 : i32
    return %c0_i32, %c0_i32_0, %c0_i32_1 : i32, i32, i32
  }
  func.func @transform_3(%arg0: i32) -> (i32, i32) {
    %c0_i32 = arith.constant 0 : i32
    %c0_i32_0 = arith.constant 0 : i32
    return %arg0, %c0_i32 : i32, i32
  }
}

</mosaic_0001>

<llo_original>
// kernel: ffn.1
$region0: #{ffn.1}
  #allocation0 [shape = 'u32[]', space=smem, size = 0x4, offset = 0x4, fixed_abs, tag = 'smem constant byte address 0x4 - core index']
  #allocation1 [shape = 'u32[144,128]{1,0:T(1,128)}', space=vmem, size = 0x12000, scoped, tag = 'internal scratch']
  %s0 = inlined_call_operand.hbm [shape: f32[16,32], index: 0, kind: input, shape index: {}]
  %s1 = inlined_call_operand.hbm [shape: f32[1,32,128], index: 1, kind: input, shape index: {}]
  %s2 = inlined_call_operand.hbm [shape: f32[1,64,32], index: 2, kind: input, shape index: {}]
  %s3 = inlined_call_operand.hbm [shape: f32[16,32], index: 3, kind: output, shape index: {}]
  %s4 = sld [smem:[#allocation0]]
  $region57: #{ffn.1} parent=0
    _
  %s6 = ssub.s32 1, %s4
  %s7 = scalar_select 0, %s6, %s4
  $region1: #{ffn.1} parent=0
    #allocation2 [shape = 'u8[8192]{0}', space=vmem, size = 0x2000, scoped, tag = 'input window, operand 0']
    #allocation3 [shape = 's32[2]{0}', space=sflag, size = 0x8, scoped, tag = 'scoped memory for ffn.1']
    #allocation4 [shape = 's32[2]{0}', space=sflag, size = 0x8, scoped, tag = 'scoped memory for ffn.1']
    #allocation5 [shape = 'u8[16384]{0}', space=vmem, size = 0x4000, scoped, tag = 'input window, operand 1, single buffered']
    #allocation6 [shape = 's32[1]{0}', space=sflag, size = 0x4, scoped, tag = 'scoped memory for ffn.1']
    #allocation7 [shape = 'u8[32768]{0}', space=vmem, size = 0x8000, scoped, tag = 'input window, operand 2, single buffered']
    #allocation8 [shape = 'u8[8192]{0}', space=vmem, size = 0x2000, scoped, tag = 'output window, operand 0']
    %8 = vsyncpa [#allocation3], 0
    %s9 = scalar_lea.sflag [#allocation3], 1
    %10 = vsyncpa %s9, 0
    %11 = vsyncpa [#allocation6], 0
    %12 = vsyncpa [#allocation4], 0
    %s13 = scalar_lea.sflag [#allocation4], 1
    %14 = vsyncpa %s13, 0
    loop: start=0, step=1, limit=4
    $region2: #{ffn.1} parent=1 // loop_pre_header
      _
    $region3: #{ffn.1} parent=1 // loop_header
      %s16 = sphi 0, %s20
      %p17 = scmp.ge.s32.totalorder %s16, 4
      %s26 = sphi 0, %s28
      %s29 = sphi 0, %s26
      %s30 = sphi 0, %s29
      %s46 = sphi 0, %s30
      %s50 = sphi 0, %s50
      %s52 = sphi 0, %s50
      %s53 = sphi 0, %s52
      %s67 = sphi 0, %s53
      %s71 = sphi 0, %s71
      %s73 = sphi 0, %s71
      %s74 = sphi 0, %s73
      %s88 = sphi 0, %s74
      %s94 = sphi 0, %s96
      %s97 = sphi 0, %s94
      %s98 = sphi 0, %s97
      %s114 = sphi 0, %s98
    $region4: #{ffn.1} parent=1 // loop_header_branch
      %19 = sbr.rel (%p17) target = $region8
    $region5: #{ffn.1} parent=1 // loop_body
      %s21 = ssub.s32 %s16, 1
      %s22 = ssub.s32 %s16, 2
      %s23 = sadd.s32 %s16, 1
      %s24 = ssub.s32 %s16, %s23
      %p25 = scmp.eq.s32.totalorder %s24, 0
      %s27 = sadd.s32 %s26, 1
      %s28 = scalar_select %p25, %s26, %s27
      %p31 = pneg %p25
      %p32 = scmp.eq.s32.totalorder %s16, 1
      %p33 = por %p31, %p32
      %p34 = scmp.ne.s32.totalorder %s26, %s29
      %p35 = scmp.eq.s32.totalorder %s16, 0
      %p36 = por %p34, %p35
      %p37 = scmp.ne.s32.totalorder %s26, %s29
      %p38 = scmp.eq.s32.totalorder %s21, 1
      %p39 = por %p37, %p38
      %p40 = scmp.ne.s32.totalorder %s29, %s30
      %p41 = scmp.eq.s32.totalorder %s21, 0
      %p42 = por %p40, %p41
      %p43 = scmp.ne.s32.totalorder %s29, %s30
      %p44 = scmp.eq.s32.totalorder %s22, 1
      %p45 = por %p43, %p44
      %p47 = scmp.ne.s32.totalorder %s30, %s46
      %p48 = scmp.eq.s32.totalorder %s22, 0
      %p49 = por %p47, %p48
      %s51 = sadd.s32 %s50, 1
      %p54 = scmp.eq.s32.totalorder %s16, 1
      %p55 = scmp.ne.s32.totalorder %s50, %s52
      %p56 = scmp.eq.s32.totalorder %s16, 0
      %p57 = por %p55, %p56
      %p58 = scmp.ne.s32.totalorder %s50, %s52
      %p59 = scmp.eq.s32.totalorder %s21, 1
      %p60 = por %p58, %p59
      %p61 = scmp.ne.s32.totalorder %s52, %s53
      %p62 = scmp.eq.s32.totalorder %s21, 0
      %p63 = por %p61, %p62
      %p64 = scmp.ne.s32.totalorder %s52, %s53
      %p65 = scmp.eq.s32.totalorder %s22, 1
      %p66 = por %p64, %p65
      %p68 = scmp.ne.s32.totalorder %s53, %s67
      %p69 = scmp.eq.s32.totalorder %s22, 0
      %p70 = por %p68, %p69
      %s72 = sadd.s32 %s71, 1
      %p75 = scmp.eq.s32.totalorder %s16, 1
      %p76 = scmp.ne.s32.totalorder %s71, %s73
      %p77 = scmp.eq.s32.totalorder %s16, 0
      %p78 = por %p76, %p77
      %p79 = scmp.ne.s32.totalorder %s71, %s73
      %p80 = scmp.eq.s32.totalorder %s21, 1
      %p81 = por %p79, %p80
      %p82 = scmp.ne.s32.totalorder %s73, %s74
      %p83 = scmp.eq.s32.totalorder %s21, 0
      %p84 = por %p82, %p83
      %p85 = scmp.ne.s32.totalorder %s73, %s74
      %p86 = scmp.eq.s32.totalorder %s22, 1
      %p87 = por %p85, %p86
      %p89 = scmp.ne.s32.totalorder %s74, %s88
      %p90 = scmp.eq.s32.totalorder %s22, 0
      %p91 = por %p89, %p90
      %s92 = ssub.s32 %s16, %s23
      %p93 = scmp.eq.s32.totalorder %s92, 0
      %s95 = sadd.s32 %s94, 1
      %s96 = scalar_select %p93, %s94, %s95
      %p99 = pneg %p93
      %p100 = scmp.eq.s32.totalorder %s16, 1
      %p101 = por %p99, %p100
      %p102 = scmp.ne.s32.totalorder %s94, %s97
      %p103 = scmp.eq.s32.totalorder %s16, 0
      %p104 = por %p102, %p103
      %p105 = scmp.ne.s32.totalorder %s94, %s97
      %p106 = scmp.eq.s32.totalorder %s21, 1
      %p107 = por %p105, %p106
      %p108 = scmp.ne.s32.totalorder %s97, %s98
      %p109 = scmp.eq.s32.totalorder %s21, 0
      %p110 = por %p108, %p109
      %p111 = scmp.ne.s32.totalorder %s97, %s98
      %p112 = scmp.eq.s32.totalorder %s22, 1
      %p113 = por %p111, %p112
      %p115 = scmp.ne.s32.totalorder %s98, %s114
      %p116 = scmp.eq.s32.totalorder %s22, 0
      %p117 = por %p115, %p116
      %p118 = scmp.le.s32.totalorder 1, %s16
      %p119 = scmp.lt.s32.totalorder %s16, 3
      %p120 = pnand %p118, %p119
      %p121 = pneg %p120
      // Predicated region
      $region9: #{ffn.1} parent=5 // pred_check
        _
      $region10: #{ffn.1} parent=5 // pred_check_branch
        %123 = sbr.rel (%p120) target = $region12
      $region11: #{ffn.1} parent=5 // pred_region
        %s124 = ssub.s32 %s16, 1
        // Predicated region
        $region13: #{ffn.1} parent=11 // pred_check
          %p125 = pneg %p63
        $region14: #{ffn.1} parent=11 // pred_check_branch
          %127 = sbr.rel (%p125) target = $region16
        $region15: #{ffn.1} parent=11 // pred_region
          %s129 = ssub.s32 512, 512
          %130 = vsyncadd [#allocation6], %s129
          %s131 = sshll.u32 [#allocation5], 4
          %s132 = int_to_ptr.vmem [resolvable:$true] %s131
          %137 = dma.hbm_to_vmem [thread:$0]  %s1, 512, %s132, [#allocation6], 128, 128, 8
        $region16: #{ffn.1} parent=11 // pred_fallthru
          _
        // Predicated region
        $region17: #{ffn.1} parent=11 // pred_check
          %p138 = pneg %p84
        $region18: #{ffn.1} parent=11 // pred_check_branch
          %140 = sbr.rel (%p138) target = $region20
        $region19: #{ffn.1} parent=11 // pred_region
          %s142 = ssub.s32 1024, 1024
          %143 = vsyncadd [#allocation6], %s142
          %s144 = sshll.u32 [#allocation7], 4
          %s145 = int_to_ptr.vmem [resolvable:$true] %s144
          %150 = dma.hbm_to_vmem [thread:$0]  %s2, 1024, %s145, [#allocation6], 128, 128, 8
        $region20: #{ffn.1} parent=11 // pred_fallthru
          _
      $region12: #{ffn.1} parent=5 // pred_fallthru
        _
      %p151 = scmp.lt.s32.totalorder %s16, 2
      // Predicated region
      $region21: #{ffn.1} parent=5 // pred_check
        %p152 = pneg %p151
      $region22: #{ffn.1} parent=5 // pred_check_branch
        %154 = sbr.rel (%p152) target = $region24
      $region23: #{ffn.1} parent=5 // pred_region
        // Predicated region
        $region25: #{ffn.1} parent=23 // pred_check
          %p155 = pneg %p36
        $region26: #{ffn.1} parent=23 // pred_check_branch
          %157 = sbr.rel (%p155) target = $region28
        $region27: #{ffn.1} parent=23 // pred_region
          %s158 = sand.u32 %s26, 1
          %s159 = scalar_lea.sflag [#allocation3], %s158
          %s160 = sand.u32 %s26, 1
          %s161 = smul.addr %s160, 8
          %s162 = scalar_lea.vmem [#allocation2], %s161
          %s164 = ssub.s32 128, 128
          %165 = vsyncadd %s159, %s164
          %s166 = smul.addr %s16, 128
          %s167 = scalar_lea.hbm %s0, %s166
          %s169 = sshll.u32 %s162, 4
          %s170 = int_to_ptr.vmem [resolvable:$true] %s169
          %172 = dma.hbm_to_vmem [thread:$0]  %s167, 128, %s170, %s159
        $region28: #{ffn.1} parent=23 // pred_fallthru
          _
      $region24: #{ffn.1} parent=5 // pred_fallthru
        _
      %p173 = scmp.le.s32.totalorder 1, %s16
      %p174 = scmp.lt.s32.totalorder %s16, 3
      %p175 = pnand %p173, %p174
      %p176 = pneg %p175
      // Predicated region
      $region29: #{ffn.1} parent=5 // pred_check
        _
      $region30: #{ffn.1} parent=5 // pred_check_branch
        %178 = sbr.rel (%p175) target = $region32
      $region31: #{ffn.1} parent=5 // pred_region
        %s179 = ssub.s32 %s16, 1
        %s180 = sand.u32 %s29, 1
        %s181 = scalar_lea.sflag [#allocation3], %s180
        %s182 = sand.u32 %s29, 1
        %s183 = smul.addr %s182, 8
        %s184 = scalar_lea.vmem [#allocation2], %s183
        // Predicated region
        $region33: #{ffn.1} parent=31 // pred_check
          %p185 = pneg %p42
        $region34: #{ffn.1} parent=31 // pred_check_branch
          %187 = sbr.rel (%p185) target = $region36
        $region35: #{ffn.1} parent=31 // pred_region
          %188 = dma.done %s181, 128
        $region36: #{ffn.1} parent=31 // pred_fallthru
          _
        // Predicated region
        $region37: #{ffn.1} parent=31 // pred_check
          %p189 = pneg %p63
        $region38: #{ffn.1} parent=31 // pred_check_branch
          %191 = sbr.rel (%p189) target = $region40
        $region39: #{ffn.1} parent=31 // pred_region
          %192 = dma.done [#allocation6], 512
        $region40: #{ffn.1} parent=31 // pred_fallthru
          _
        // Predicated region
        $region41: #{ffn.1} parent=31 // pred_check
          %p193 = pneg %p84
        $region42: #{ffn.1} parent=31 // pred_check_branch
          %195 = sbr.rel (%p193) target = $region44
        $region43: #{ffn.1} parent=31 // pred_region
          %196 = dma.done [#allocation6], 1024
        $region44: #{ffn.1} parent=31 // pred_fallthru
          _
        %s197 = sand.u32 %s29, 1
        %s198 = scalar_lea.sflag [#allocation3], %s197
        %s199 = sand.u32 %s29, 1
        %s200 = smul.addr %s199, 8
        %s201 = scalar_lea.vmem [#allocation2], %s200
        %p202 = pneg %p42
        %p203 = pneg %p39
        %p204 = pneg %p63
        %p205 = pneg %p60
        %p206 = pneg %p84
        %p207 = pneg %p81
        %p208 = pneg %p110
        %p209 = pneg %p107
        %s210 = sand.u32 %s97, 1
        %s211 = scalar_lea.sflag [#allocation4], %s210
        %s212 = sand.u32 %s97, 1
        %s213 = smul.addr %s212, 8
        %s214 = scalar_lea.vmem [#allocation8], %s213
        %v215 = vld [vmem:[%s184] sm:$0xff]
        %v216 = vld [vmem:[#allocation5] sm:$0xff]
        %v217 = vld [vmem:[#allocation5 + $0x8] sm:$0xff]
        %v218 = vld [vmem:[#allocation5 + $0x10] sm:$0xff]
        %v219 = vld [vmem:[#allocation5 + $0x18] sm:$0xff]
        %vm220 = vcmask 261120
        %v222 = vsel %vm220, %v215, 0
        %224 = vmatprep.subr.mxu0 0.0
        %225 = vmatpush1.msra.mxu0 %v216
        %226 = vmatprep.subr.mxu0 0.0
        %227 = vmatpush1.msra.mxu0 %v217
        %228 = vmatprep.subr.mxu0 0.0
        %229 = vmatpush1.msra.mxu0 %v218
        %230 = vmatprep.subr.mxu0 0.0
        %231 = vmatpush1.msra.mxu0 %v219
        %232 = vmatprep.subr.mxu0 0.0
        %233 = vmatpush1.msra.mxu0 0.0
        %234 = vmatprep.subr.mxu0 0.0
        %235 = vmatpush1.msra.mxu0 0.0
        %236 = vmatprep.subr.mxu0 0.0
        %237 = vmatpush1.msra.mxu0 0.0
        %238 = vmatprep.subr.mxu0 0.0
        %239 = vmatpush1.msra.mxu0 0.0
        %240 = vmatprep.subr.mxu0 0.0
        %241 = vmatpush1.msra.mxu0 0.0
        %242 = vmatprep.subr.mxu0 0.0
        %243 = vmatpush1.msra.mxu0 0.0
        %244 = vmatprep.subr.mxu0 0.0
        %245 = vmatpush1.msra.mxu0 0.0
        %246 = vmatprep.subr.mxu0 0.0
        %247 = vmatpush1.msra.mxu0 0.0
        %248 = vmatprep.subr.mxu0 0.0
        %249 = vmatpush1.msra.mxu0 0.0
        %250 = vmatprep.subr.mxu0 0.0
        %251 = vmatpush1.msra.mxu0 0.0
        %252 = vmatprep.subr.mxu0 0.0
        %253 = vmatpush1.msra.mxu0 0.0
        %254 = vmatprep.subr.mxu0 0.0
        %255 = vmatpush1.msra.mxu0 0.0
        %256 = vmatprep.subr.mxu0 0.0
        %257 = vmatpush1.msra.mxu0 0.0
        %258 = vmatprep.subr.mxu0 0.0
        %259 = vmatpush1.msra.mxu0 0.0
        %260 = vmatprep.subr.mxu0 0.0
        %261 = vmatpush1.msra.mxu0 0.0
        %262 = vmatprep.subr.mxu0 0.0
        %263 = vmatpush1.msra.mxu0 0.0
        %264 = vmatprep.subr.mxu0 0.0
        %265 = vmatpush1.msra.mxu0 0.0
        %266 = vmatprep.subr.mxu0 0.0
        %267 = vmatpush1.msra.mxu0 0.0
        %268 = vmatprep.subr.mxu0 0.0
        %269 = vmatpush1.msra.mxu0 0.0
        %270 = vmatprep.subr.mxu0 0.0
        %271 = vmatpush1.msra.mxu0 0.0
        %272 = vmatprep.subr.mxu0 0.0
        %273 = vmatpush1.msra.mxu0 0.0
        %274 = vmatprep.subr.mxu0 0.0
        %275 = vmatpush1.msra.mxu0 0.0
        %276 = vmatprep.subr.mxu0 0.0
        %277 = vmatpush1.msra.mxu0 0.0
        %278 = vmatprep.subr.mxu0 0.0
        %279 = vmatpush1.msra.mxu0 0.0
        %280 = vmatprep.subr.mxu0 0.0
        %281 = vmatpush1.msra.mxu0 0.0
        %282 = vmatprep.subr.mxu0 0.0
        %283 = vmatpush1.msra.mxu0 0.0
        %284 = vmatprep.subr.mxu0 0.0
        %285 = vmatpush1.msra.mxu0 0.0
        %286 = vmatprep.subr.mxu0 0.0
        %287 = vmatpush1.msra.mxu0 0.0
        %288 = vmatprep.mubr.f32.mxu0 0.0
        %289 = vmatmul.mubr.f32.gmra.mrb[0].mxu0 %v222
        %v290 = vpop.f32.mrb[0].mxu0
        %v291 = vadd.f32 0.0, %v290
        %v292 = vpop.f32.mrb[0].mxu0
        %293 = vdwg.mxu0
        %v294 = vxor.u32 %v291, 2147483648
        %v295 = vmul.f32 %v294, 1.442695
        %v296 = vpow.pop %v295
        %v297 = vadd.f32 %v296, 1.0
        %v298 = vrcp.pop %v297
        %v299 = vmul.f32 1.0, %v298
        %v300 = vmul.f32 %v291, %v299
        %302 = vrot.lane.b32.xlu0 %v291, 64
        %v303 = vpop.permute.xlu0 %302
        %v305 = vmul.f32 %v300, %v303
        %v306 = vld [vmem:[#allocation7] sm:$0xff]
        %v307 = vld [vmem:[#allocation7 + $0x8] sm:$0xff]
        %v308 = vld [vmem:[#allocation7 + $0x10] sm:$0xff]
        %v309 = vld [vmem:[#allocation7 + $0x18] sm:$0xff]
        %v310 = vld [vmem:[#allocation7 + $0x20] sm:$0xff]
        %v311 = vld [vmem:[#allocation7 + $0x28] sm:$0xff]
        %v312 = vld [vmem:[#allocation7 + $0x30] sm:$0xff]
        %v313 = vld [vmem:[#allocation7 + $0x38] sm:$0xff]
        %vm314 = vcmask 523264
        %v316 = vsel %vm314, %v305, 0
        %318 = vmatprep.subr.mxu0 0.0
        %319 = vmatpush1.msra.mxu0 %v306
        %320 = vmatprep.subr.mxu0 0.0
        %321 = vmatpush1.msra.mxu0 %v307
        %322 = vmatprep.subr.mxu0 0.0
        %323 = vmatpush1.msra.mxu0 %v308
        %324 = vmatprep.subr.mxu0 0.0
        %325 = vmatpush1.msra.mxu0 %v309
        %326 = vmatprep.subr.mxu0 0.0
        %327 = vmatpush1.msra.mxu0 %v310
        %328 = vmatprep.subr.mxu0 0.0
        %329 = vmatpush1.msra.mxu0 %v311
        %330 = vmatprep.subr.mxu0 0.0
        %331 = vmatpush1.msra.mxu0 %v312
        %332 = vmatprep.subr.mxu0 0.0
        %333 = vmatpush1.msra.mxu0 %v313
        %334 = vmatprep.subr.mxu0 0.0
        %335 = vmatpush1.msra.mxu0 0.0
        %336 = vmatprep.subr.mxu0 0.0
        %337 = vmatpush1.msra.mxu0 0.0
        %338 = vmatprep.subr.mxu0 0.0
        %339 = vmatpush1.msra.mxu0 0.0
        %340 = vmatprep.subr.mxu0 0.0
        %341 = vmatpush1.msra.mxu0 0.0
        %342 = vmatprep.subr.mxu0 0.0
        %343 = vmatpush1.msra.mxu0 0.0
        %344 = vmatprep.subr.mxu0 0.0
        %345 = vmatpush1.msra.mxu0 0.0
        %346 = vmatprep.subr.mxu0 0.0
        %347 = vmatpush1.msra.mxu0 0.0
        %348 = vmatprep.subr.mxu0 0.0
        %349 = vmatpush1.msra.mxu0 0.0
        %350 = vmatprep.subr.mxu0 0.0
        %351 = vmatpush1.msra.mxu0 0.0
        %352 = vmatprep.subr.mxu0 0.0
        %353 = vmatpush1.msra.mxu0 0.0
        %354 = vmatprep.subr.mxu0 0.0
        %355 = vmatpush1.msra.mxu0 0.0
        %356 = vmatprep.subr.mxu0 0.0
        %357 = vmatpush1.msra.mxu0 0.0
        %358 = vmatprep.subr.mxu0 0.0
        %359 = vmatpush1.msra.mxu0 0.0
        %360 = vmatprep.subr.mxu0 0.0
        %361 = vmatpush1.msra.mxu0 0.0
        %362 = vmatprep.subr.mxu0 0.0
        %363 = vmatpush1.msra.mxu0 0.0
        %364 = vmatprep.subr.mxu0 0.0
        %365 = vmatpush1.msra.mxu0 0.0
        %366 = vmatprep.subr.mxu0 0.0
        %367 = vmatpush1.msra.mxu0 0.0
        %368 = vmatprep.subr.mxu0 0.0
        %369 = vmatpush1.msra.mxu0 0.0
        %370 = vmatprep.subr.mxu0 0.0
        %371 = vmatpush1.msra.mxu0 0.0
        %372 = vmatprep.subr.mxu0 0.0
        %373 = vmatpush1.msra.mxu0 0.0
        %374 = vmatprep.subr.mxu0 0.0
        %375 = vmatpush1.msra.mxu0 0.0
        %376 = vmatprep.subr.mxu0 0.0
        %377 = vmatpush1.msra.mxu0 0.0
        %378 = vmatprep.subr.mxu0 0.0
        %379 = vmatpush1.msra.mxu0 0.0
        %380 = vmatprep.subr.mxu0 0.0
        %381 = vmatpush1.msra.mxu0 0.0
        %382 = vmatprep.mubr.f32.mxu0 0.0
        %383 = vmatmul.mubr.f32.gmra.mrb[0].mxu0 %v316
        %v384 = vpop.f32.mrb[0].mxu0
        %v385 = vadd.f32 0.0, %v384
        %v386 = vpop.f32.mrb[0].mxu0
        %387 = vdwg.mxu0
        %388 = vst.msk [vmem:[%s214] sm:$0xff] %vm220, %v385
        %s389 = sand.u32 %s97, 1
        %s390 = scalar_lea.sflag [#allocation4], %s389
        %s391 = sand.u32 %s97, 1
        %s392 = smul.addr %s391, 8
        %s393 = scalar_lea.vmem [#allocation8], %s392
        // Predicated region
        $region45: #{ffn.1} parent=31 // pred_check
          %p394 = pneg %p107
        $region46: #{ffn.1} parent=31 // pred_check_branch
          %396 = sbr.rel (%p394) target = $region48
        $region47: #{ffn.1} parent=31 // pred_region
          %s398 = ssub.s32 128, 128
          %399 = vsyncadd %s390, %s398
          %s400 = smul.addr %s21, 128
          %s401 = scalar_lea.hbm %s3, %s400
          %s403 = sshll.u32 %s393, 4
          %s404 = int_to_ptr.vmem [resolvable:$true] %s403
          %406 = dma.vmem_to_hbm [thread:$0]  %s404, 128, %s401, %s390
        $region48: #{ffn.1} parent=31 // pred_fallthru
          _
      $region32: #{ffn.1} parent=5 // pred_fallthru
        _
      %p407 = scmp.le.s32.totalorder 2, %s16
      // Predicated region
      $region49: #{ffn.1} parent=5 // pred_check
        %p408 = pneg %p407
      $region50: #{ffn.1} parent=5 // pred_check_branch
        %410 = sbr.rel (%p408) target = $region52
      $region51: #{ffn.1} parent=5 // pred_region
        %s411 = ssub.s32 %s16, 2
        // Predicated region
        $region53: #{ffn.1} parent=51 // pred_check
          %p412 = pneg %p113
        $region54: #{ffn.1} parent=51 // pred_check_branch
          %414 = sbr.rel (%p412) target = $region56
        $region55: #{ffn.1} parent=51 // pred_region
          %s415 = sand.u32 %s98, 1
          %s416 = scalar_lea.sflag [#allocation4], %s415
          %s417 = sand.u32 %s98, 1
          %s418 = smul.addr %s417, 8
          %s419 = scalar_lea.vmem [#allocation8], %s418
          %420 = dma.done %s416, 128
        $region56: #{ffn.1} parent=51 // pred_fallthru
          _
      $region52: #{ffn.1} parent=5 // pred_fallthru
        _
    $region6: #{ffn.1} parent=1 // loop_footer
      %s20 = sadd.s32 1, %s16
    $region7: #{ffn.1} parent=1 // loop_footer_branch
      %15 = sbr.rel target = $region3
    $region8: #{ffn.1} parent=1 // loop_exit
      _
    %421 = vsyncpa [#allocation3], 1
    %s422 = scalar_lea.sflag [#allocation3], 1
    %423 = vsyncpa %s422, 1
    %424 = vsyncpa [#allocation6], 1
    %425 = vsyncpa [#allocation4], 1
    %s426 = scalar_lea.sflag [#allocation4], 1
    %427 = vsyncpa %s426, 1

</llo_original>
